<compile_context>
chip_gen: v5e
topology: v5e:2x2
jax: 0.10.0
libtpu: 0.0.40
codegen_flags: <defaults>
</compile_context>

<pallas_src>
import jax
import jax.numpy as jnp
from jax.experimental import pallas as pl
from jax.experimental.pallas import tpu as pltpu

# Sizes from the reference script (FashionMNIST).
N0 = 28 * 28                  # flattened image size
HIDDEN = [13, 17]             # hidden_layer_neurons
NL = 10                       # number of classes
LAYER_SIZES = [N0] + HIDDEN + [NL]

PAD = 128                     # lane-dense padded width for hidden/output dims
DEFAULT_TB = 4096             # batch tile; f32 x tile = 12.25 MiB per buffer


def _round_up(x, m):
    return ((x + m - 1) // m) * m


def mlp_kernel(x_ref, w1_ref, b1_ref, w2_ref, b2_ref, w3_ref, b3_ref, o_ref):
    """One batch tile of the full MLP.

    x_ref:   (TB, 784)  f32  (cast to bf16 in-register, no wrapper convert)
    w*_ref:  (in, 128)  bf16 (zero-padded columns/rows; VMEM-resident)
    b*_ref:  (1, 128)   f32
    o_ref:   (TB, 128)  bf16 (logits in first 10 lanes)
    """
    x = x_ref[...].astype(jnp.bfloat16)                         # VPU cast, hidden under DMA
    h1 = jnp.dot(x, w1_ref[...], preferred_element_type=jnp.float32) + b1_ref[...]
    h1 = jnp.maximum(h1, 0.0).astype(jnp.bfloat16)              # ReLU, back to bf16 for MXU
    h2 = jnp.dot(h1, w2_ref[...], preferred_element_type=jnp.float32) + b2_ref[...]
    h2 = jnp.maximum(h2, 0.0).astype(jnp.bfloat16)
    out = jnp.dot(h2, w3_ref[...], preferred_element_type=jnp.float32) + b3_ref[...]
    o_ref[...] = out.astype(o_ref.dtype)                        # bf16, 128-lane unmasked store


def _pad_params(params):
    """Zero-pad all weights/biases to 128-lane widths; weights -> bf16, biases -> f32."""
    def pad2(a, rows, cols):
        r, c = a.shape
        return jnp.pad(a, ((0, rows - r), (0, cols - c)))

    w1 = pad2(params["w1"], N0, PAD).astype(jnp.bfloat16)      # (784, 128)
    b1 = pad2(params["b1"], 1, PAD).astype(jnp.float32)        # (1, 128)
    w2 = pad2(params["w2"], PAD, PAD).astype(jnp.bfloat16)     # (128, 128)
    b2 = pad2(params["b2"], 1, PAD).astype(jnp.float32)
    w3 = pad2(params["w3"], PAD, PAD).astype(jnp.bfloat16)     # (128, 128)
    b3 = pad2(params["b3"], 1, PAD).astype(jnp.float32)
    return w1, b1, w2, b2, w3, b3


def neural_network_forward(x_nchw, params, tb=DEFAULT_TB):
    """Mirrors NeuralNetwork.forward.

    x_nchw: (B, 1, 28, 28) float32 (NCHW, like the PyTorch DataLoader).
    params: dict with w1..w3 as (in, out) and b1..b3 as (1, out), float32.
    Returns (B, 10) float32 logits.
    """
    b = x_nchw.shape[0]
    x_flat = x_nchw.reshape(b, -1)                             # nn.Flatten; stays f32 (no copy)

    # Batch tile: multiple of 8 sublanes, and at most ceil(b/2) so the grid has
    # >= 2 steps (both v7x TensorCores get work under "parallel" semantics).
    half = _round_up(max(pl.cdiv(b, 2), 1), 8)
    tb = max(8, min(_round_up(tb, 8), half))
    grid = (pl.cdiv(b, tb),)                                   # ragged last block, no jnp.pad

    w1, b1, w2, b2, w3, b3 = _pad_params(params)

    x_spec = pl.BlockSpec((tb, N0), lambda i: (i, 0))
    resident = lambda shape: pl.BlockSpec(shape, lambda i: (0, 0))  # weights stay in VMEM
    out_spec = pl.BlockSpec((tb, PAD), lambda i: (i, 0))

    # Scoped-VMEM budget: double-buffered x (f32) + out (bf16) tiles, plus
    # (double-buffered) resident weights, plus margin. Clamp to [32 MiB, 56 MiB]
    # so v5e's 16 MiB default never limits us and v7x's 64 MiB is never exceeded.
    x_buf = tb * N0 * 4
    out_buf = tb * PAD * 2
    w_bytes = (N0 * PAD + 2 * PAD * PAD) * 2 + 3 * PAD * 4
    vmem_need = 2 * (x_buf + out_buf + w_bytes) + (1 << 20)
    vmem_limit = int(min(max(vmem_need, 32 << 20), 56 << 20))

    out = pl.pallas_call(
        mlp_kernel,
        out_shape=jax.ShapeDtypeStruct((b, PAD), jnp.bfloat16),
        grid=grid,
        in_specs=[
            x_spec,
            resident(w1.shape), resident(b1.shape),
            resident(w2.shape), resident(b2.shape),
            resident(w3.shape), resident(b3.shape),
        ],
        out_specs=out_spec,
        compiler_params=pltpu.CompilerParams(
            dimension_semantics=("parallel",),      # megacore on v7x; harmless elsewhere
            vmem_limit_bytes=vmem_limit,
        ),
    )(x_flat, w1, b1, w2, b2, w3, b3)

    # Tiny slice + cast: only the (b, 10) valid logits go back to f32.
    return out[:b, :NL].astype(jnp.float32)


def init_params(key):
    """Deterministic init matching nn.Linear default U(-1/sqrt(fan_in), +1/sqrt(fan_in))."""
    params = {}
    ks = jax.random.split(key, 2 * (len(LAYER_SIZES) - 1))
    for i, (fan_in, fan_out) in enumerate(zip(LAYER_SIZES[:-1], LAYER_SIZES[1:])):
        bound = 1.0 / jnp.sqrt(jnp.float32(fan_in))
        w = jax.random.uniform(ks[2 * i], (fan_in, fan_out), jnp.float32, -bound, bound)
        bias = jax.random.uniform(ks[2 * i + 1], (1, fan_out), jnp.float32, -bound, bound)
        params[f"w{i + 1}"] = w
        params[f"b{i + 1}"] = bias
    return params


def reference_forward(x_nchw, params):
    """Pure-JAX reference mirroring the kernel's bf16-matmul / f32-accumulate math."""
    x = x_nchw.reshape(x_nchw.shape[0], -1).astype(jnp.bfloat16)
    w1 = params["w1"].astype(jnp.bfloat16)
    w2 = params["w2"].astype(jnp.bfloat16)
    w3 = params["w3"].astype(jnp.bfloat16)
    h = jnp.dot(x, w1, preferred_element_type=jnp.float32) + params["b1"]
    h = jnp.maximum(h, 0.0).astype(jnp.bfloat16)
    h = jnp.dot(h, w2, preferred_element_type=jnp.float32) + params["b2"]
    h = jnp.maximum(h, 0.0).astype(jnp.bfloat16)
    return jnp.dot(h, w3, preferred_element_type=jnp.float32) + params["b3"]


if __name__ == "__main__":
    key = jax.random.PRNGKey(0)
    k_params, k_x = jax.random.split(key)

    params = init_params(k_params)
    # Small batch of fake FashionMNIST images, NCHW like the PyTorch DataLoader.
    # Batch of 20 with a tile of 8 exercises batch tiling (grid=(3,)) and the
    # ragged (masked) last block without any wrapper-side padding.
    batch = 20
    x = jax.random.normal(k_x, (batch, 1, 28, 28), dtype=jnp.float32)

    out = neural_network_forward(x, params, tb=8)
    out = jax.block_until_ready(out)

    ref = reference_forward(x, params)
    assert out.shape == (batch, NL), out.shape
    # Tolerance covers the bf16 rounding of the stored logits (<~0.4% relative).
    assert jnp.allclose(out, ref, atol=3e-2, rtol=3e-2), float(jnp.max(jnp.abs(out - ref)))

    print("KERNEL_OK")
</pallas_src>

<mosaic_0001>
module attributes {stable_mosaic.version = 11 : i64} {
  func.func @mlp_kernel(%arg0: i32, %arg1: memref<8x784xf32, #tpu.memory_space<vmem>>, %arg2: memref<784x128xbf16, #tpu.memory_space<vmem>>, %arg3: memref<1x128xf32, #tpu.memory_space<vmem>>, %arg4: memref<128x128xbf16, #tpu.memory_space<vmem>>, %arg5: memref<1x128xf32, #tpu.memory_space<vmem>>, %arg6: memref<128x128xbf16, #tpu.memory_space<vmem>>, %arg7: memref<1x128xf32, #tpu.memory_space<vmem>>, %arg8: memref<8x128xbf16, #tpu.memory_space<vmem>>) attributes {dimension_semantics = [#tpu.dimension_semantics<parallel>], iteration_bounds = array<i64: 3>, scalar_prefetch = 0 : i64, scratch_operands = 0 : i64, tpu.core_type = #tpu.core_type<tc>, window_params = [{transform_indices = @transform_0, window_bounds = array<i64: 8, 784>}, {pipeline_mode = #tpu.pipeline_mode<synchronous>, transform_indices = @transform_1, window_bounds = array<i64: 784, 128>}, {pipeline_mode = #tpu.pipeline_mode<synchronous>, transform_indices = @transform_2, window_bounds = array<i64: 1, 128>}, {pipeline_mode = #tpu.pipeline_mode<synchronous>, transform_indices = @transform_3, window_bounds = array<i64: 128, 128>}, {pipeline_mode = #tpu.pipeline_mode<synchronous>, transform_indices = @transform_4, window_bounds = array<i64: 1, 128>}, {pipeline_mode = #tpu.pipeline_mode<synchronous>, transform_indices = @transform_5, window_bounds = array<i64: 128, 128>}, {pipeline_mode = #tpu.pipeline_mode<synchronous>, transform_indices = @transform_6, window_bounds = array<i64: 1, 128>}, {transform_indices = @transform_7, window_bounds = array<i64: 8, 128>}]} {
    %c0 = arith.constant 0 : index
    %c0_0 = arith.constant 0 : index
    %0 = vector.load %arg1[%c0, %c0_0] : memref<8x784xf32, #tpu.memory_space<vmem>>, vector<8x784xf32>
    %1 = arith.truncf %0 : vector<8x784xf32> to vector<8x784xbf16>
    %c0_1 = arith.constant 0 : index
    %c0_2 = arith.constant 0 : index
    %2 = vector.load %arg2[%c0_1, %c0_2] : memref<784x128xbf16, #tpu.memory_space<vmem>>, vector<784x128xbf16>
    %cst = arith.constant dense<0.000000e+00> : vector<8x128xf32>
    %3 = tpu.matmul %1, %2, %cst {dimension_numbers = #tpu.dot_dimension_numbers<[1], [0], [0], [1], [0, 0, 1, 1], [], []>} : vector<8x784xbf16>, vector<784x128xbf16>, vector<8x128xf32> -> vector<8x128xf32>
    %c0_3 = arith.constant 0 : index
    %c0_4 = arith.constant 0 : index
    %4 = vector.load %arg3[%c0_3, %c0_4] : memref<1x128xf32, #tpu.memory_space<vmem>>, vector<1x128xf32>
    %5 = vector.broadcast %4 : vector<1x128xf32> to vector<8x128xf32>
    %6 = arith.addf %3, %5 : vector<8x128xf32>
    %cst_5 = arith.constant 0.000000e+00 : f32
    %7 = vector.broadcast %cst_5 : f32 to vector<8x128xf32>
    %8 = arith.maximumf %6, %7 : vector<8x128xf32>
    %9 = arith.truncf %8 : vector<8x128xf32> to vector<8x128xbf16>
    %c0_6 = arith.constant 0 : index
    %c0_7 = arith.constant 0 : index
    %10 = vector.load %arg4[%c0_6, %c0_7] : memref<128x128xbf16, #tpu.memory_space<vmem>>, vector<128x128xbf16>
    %cst_8 = arith.constant dense<0.000000e+00> : vector<8x128xf32>
    %11 = tpu.matmul %9, %10, %cst_8 {dimension_numbers = #tpu.dot_dimension_numbers<[1], [0], [0], [1], [0, 0, 1, 1], [], []>} : vector<8x128xbf16>, vector<128x128xbf16>, vector<8x128xf32> -> vector<8x128xf32>
    %c0_9 = arith.constant 0 : index
    %c0_10 = arith.constant 0 : index
    %12 = vector.load %arg5[%c0_9, %c0_10] : memref<1x128xf32, #tpu.memory_space<vmem>>, vector<1x128xf32>
    %13 = vector.broadcast %12 : vector<1x128xf32> to vector<8x128xf32>
    %14 = arith.addf %11, %13 : vector<8x128xf32>
    %cst_11 = arith.constant 0.000000e+00 : f32
    %15 = vector.broadcast %cst_11 : f32 to vector<8x128xf32>
    %16 = arith.maximumf %14, %15 : vector<8x128xf32>
    %17 = arith.truncf %16 : vector<8x128xf32> to vector<8x128xbf16>
    %c0_12 = arith.constant 0 : index
    %c0_13 = arith.constant 0 : index
    %18 = vector.load %arg6[%c0_12, %c0_13] : memref<128x128xbf16, #tpu.memory_space<vmem>>, vector<128x128xbf16>
    %cst_14 = arith.constant dense<0.000000e+00> : vector<8x128xf32>
    %19 = tpu.matmul %17, %18, %cst_14 {dimension_numbers = #tpu.dot_dimension_numbers<[1], [0], [0], [1], [0, 0, 1, 1], [], []>} : vector<8x128xbf16>, vector<128x128xbf16>, vector<8x128xf32> -> vector<8x128xf32>
    %c0_15 = arith.constant 0 : index
    %c0_16 = arith.constant 0 : index
    %20 = vector.load %arg7[%c0_15, %c0_16] : memref<1x128xf32, #tpu.memory_space<vmem>>, vector<1x128xf32>
    %21 = vector.broadcast %20 : vector<1x128xf32> to vector<8x128xf32>
    %22 = arith.addf %19, %21 : vector<8x128xf32>
    %23 = arith.truncf %22 : vector<8x128xf32> to vector<8x128xbf16>
    %c0_17 = arith.constant 0 : index
    %c0_18 = arith.constant 0 : index
    %24 = vector.load %arg8[%c0_17, %c0_18] : memref<8x128xbf16, #tpu.memory_space<vmem>>, vector<8x128xbf16>
    tpu.vector_store %arg8[%c0_17, %c0_18], %23 {strides = array<i32>} : memref<8x128xbf16, #tpu.memory_space<vmem>>, vector<8x128xbf16>,
    return
  }
  func.func @transform_0(%arg0: i32) -> (i32, i32) {
    %c0_i32 = arith.constant 0 : i32
    %c0_i32_0 = arith.constant 0 : i32
    return %arg0, %c0_i32 : i32, i32
  }
  func.func @transform_1(%arg0: i32) -> (i32, i32) {
    %c0_i32 = arith.constant 0 : i32
    %c0_i32_0 = arith.constant 0 : i32
    %c0_i32_1 = arith.constant 0 : i32
    return %c0_i32, %c0_i32_0 : i32, i32
  }
  func.func @transform_2(%arg0: i32) -> (i32, i32) {
    %c0_i32 = arith.constant 0 : i32
    %c0_i32_0 = arith.constant 0 : i32
    %c0_i32_1 = arith.constant 0 : i32
    return %c0_i32, %c0_i32_0 : i32, i32
  }
  func.func @transform_3(%arg0: i32) -> (i32, i32) {
    %c0_i32 = arith.constant 0 : i32
    %c0_i32_0 = arith.constant 0 : i32
    %c0_i32_1 = arith.constant 0 : i32
    return %c0_i32, %c0_i32_0 : i32, i32
  }
  func.func @transform_4(%arg0: i32) -> (i32, i32) {
    %c0_i32 = arith.constant 0 : i32
    %c0_i32_0 = arith.constant 0 : i32
    %c0_i32_1 = arith.constant 0 : i32
    return %c0_i32, %c0_i32_0 : i32, i32
  }
  func.func @transform_5(%arg0: i32) -> (i32, i32) {
    %c0_i32 = arith.constant 0 : i32
    %c0_i32_0 = arith.constant 0 : i32
    %c0_i32_1 = arith.constant 0 : i32
    return %c0_i32, %c0_i32_0 : i32, i32
  }
  func.func @transform_6(%arg0: i32) -> (i32, i32) {
    %c0_i32 = arith.constant 0 : i32
    %c0_i32_0 = arith.constant 0 : i32
    %c0_i32_1 = arith.constant 0 : i32
    return %c0_i32, %c0_i32_0 : i32, i32
  }
  func.func @transform_7(%arg0: i32) -> (i32, i32) {
    %c0_i32 = arith.constant 0 : i32
    %c0_i32_0 = arith.constant 0 : i32
    return %arg0, %c0_i32 : i32, i32
  }
}

</mosaic_0001>

<llo_original>
// kernel: tpu_custom_call.1
$region0: #{tpu_custom_call.1}
  #allocation0 [shape = 'u32[]', space=smem, size = 0x4, offset = 0x4, fixed_abs, tag = 'smem constant byte address 0x4 - core index']
  #allocation1 [shape = 'u32[72,128]{1,0:T(1,128)}', space=vmem, size = 0x9000, scoped, tag = 'internal scratch']
  %s0 = inlined_call_operand.hbm [shape: f32[20,784], index: 0, kind: input, shape index: {}]
  %s1 = inlined_call_operand.hbm [shape: bf16[784,128], index: 1, kind: input, shape index: {}]
  %s2 = inlined_call_operand.vmem [shape: f32[1,128], index: 2, kind: input, shape index: {}]
  %s3 = inlined_call_operand.hbm [shape: bf16[128,128], index: 3, kind: input, shape index: {}]
  %s4 = inlined_call_operand.vmem [shape: f32[1,128], index: 4, kind: input, shape index: {}]
  %s5 = inlined_call_operand.hbm [shape: bf16[128,128], index: 5, kind: input, shape index: {}]
  %s6 = inlined_call_operand.vmem [shape: f32[1,128], index: 6, kind: input, shape index: {}]
  %s7 = inlined_call_operand.hbm [shape: bf16[20,128], index: 7, kind: output, shape index: {}]
  %s8 = sld [smem:[#allocation0]]
  $region77: #{tpu_custom_call.1} parent=0
    _
  %s10 = ssub.s32 1, %s8
  %s11 = scalar_select 0, %s10, %s8
  $region1: #{tpu_custom_call.1} parent=0
    #allocation2 [shape = 'u8[57344]{0}', space=vmem, size = 0xe000, scoped, tag = 'input window, operand 0']
    #allocation3 [shape = 's32[2]{0}', space=sflag, size = 0x8, scoped, tag = 'scoped memory for tpu_custom_call.1']
    #allocation4 [shape = 's32[2]{0}', space=sflag, size = 0x8, scoped, tag = 'scoped memory for tpu_custom_call.1']
    #allocation5 [shape = 'u8[200704]{0}', space=vmem, size = 0x31000, scoped, tag = 'input window, operand 1, single buffered']
    #allocation6 [shape = 's32[1]{0}', space=sflag, size = 0x4, scoped, tag = 'scoped memory for tpu_custom_call.1']
    #allocation7 [shape = 'u8[32768]{0}', space=vmem, size = 0x8000, scoped, tag = 'input window, operand 3, single buffered']
    #allocation8 [shape = 'u8[32768]{0}', space=vmem, size = 0x8000, scoped, tag = 'input window, operand 5, single buffered']
    #allocation9 [shape = 's32[1]{0}', space=sflag, size = 0x4, scoped, tag = 'scoped memory for tpu_custom_call.1']
    #allocation10 [shape = 'u8[4096]{0}', space=vmem, size = 0x1000, scoped, tag = 'output window, operand 0']
    %12 = vsyncpa [#allocation3], 0
    %s13 = scalar_lea.sflag [#allocation3], 1
    %14 = vsyncpa %s13, 0
    %15 = vsyncpa [#allocation6], 0
    %16 = vsyncpa [#allocation9], 0
    %17 = vsyncpa [#allocation4], 0
    %s18 = scalar_lea.sflag [#allocation4], 1
    %19 = vsyncpa %s18, 0
    loop: start=0, step=1, limit=5
    $region2: #{tpu_custom_call.1} parent=1 // loop_pre_header
      _
    $region3: #{tpu_custom_call.1} parent=1 // loop_header
      %s21 = sphi 0, %s25
      %p22 = scmp.ge.s32.totalorder %s21, 5
      %s31 = sphi 0, %s33
      %s34 = sphi 0, %s31
      %s35 = sphi 0, %s34
      %s51 = sphi 0, %s35
      %s55 = sphi 0, %s55
      %s57 = sphi 0, %s55
      %s58 = sphi 0, %s57
      %s72 = sphi 0, %s58
      %s76 = sphi 0, %s76
      %s78 = sphi 0, %s76
      %s79 = sphi 0, %s78
      %s93 = sphi 0, %s79
      %s97 = sphi 0, %s97
      %s99 = sphi 0, %s97
      %s100 = sphi 0, %s99
      %s114 = sphi 0, %s100
      %s118 = sphi 0, %s118
      %s120 = sphi 0, %s118
      %s121 = sphi 0, %s120
      %s135 = sphi 0, %s121
      %s139 = sphi 0, %s139
      %s141 = sphi 0, %s139
      %s142 = sphi 0, %s141
      %s156 = sphi 0, %s142
      %s160 = sphi 0, %s160
      %s162 = sphi 0, %s160
      %s163 = sphi 0, %s162
      %s177 = sphi 0, %s163
      %s183 = sphi 0, %s185
      %s186 = sphi 0, %s183
      %s187 = sphi 0, %s186
      %s203 = sphi 0, %s187
    $region4: #{tpu_custom_call.1} parent=1 // loop_header_branch
      %24 = sbr.rel (%p22) target = $region8
    $region5: #{tpu_custom_call.1} parent=1 // loop_body
      %s26 = ssub.s32 %s21, 1
      %s27 = ssub.s32 %s21, 2
      %s28 = sadd.s32 %s21, 1
      %s29 = ssub.s32 %s21, %s28
      %p30 = scmp.eq.s32.totalorder %s29, 0
      %s32 = sadd.s32 %s31, 1
      %s33 = scalar_select %p30, %s31, %s32
      %p36 = pneg %p30
      %p37 = scmp.eq.s32.totalorder %s21, 2
      %p38 = por %p36, %p37
      %p39 = scmp.ne.s32.totalorder %s31, %s34
      %p40 = scmp.eq.s32.totalorder %s21, 0
      %p41 = por %p39, %p40
      %p42 = scmp.ne.s32.totalorder %s31, %s34
      %p43 = scmp.eq.s32.totalorder %s26, 2
      %p44 = por %p42, %p43
      %p45 = scmp.ne.s32.totalorder %s34, %s35
      %p46 = scmp.eq.s32.totalorder %s26, 0
      %p47 = por %p45, %p46
      %p48 = scmp.ne.s32.totalorder %s34, %s35
      %p49 = scmp.eq.s32.totalorder %s27, 2
      %p50 = por %p48, %p49
      %p52 = scmp.ne.s32.totalorder %s35, %s51
      %p53 = scmp.eq.s32.totalorder %s27, 0
      %p54 = por %p52, %p53
      %s56 = sadd.s32 %s55, 1
      %p59 = scmp.eq.s32.totalorder %s21, 2
      %p60 = scmp.ne.s32.totalorder %s55, %s57
      %p61 = scmp.eq.s32.totalorder %s21, 0
      %p62 = por %p60, %p61
      %p63 = scmp.ne.s32.totalorder %s55, %s57
      %p64 = scmp.eq.s32.totalorder %s26, 2
      %p65 = por %p63, %p64
      %p66 = scmp.ne.s32.totalorder %s57, %s58
      %p67 = scmp.eq.s32.totalorder %s26, 0
      %p68 = por %p66, %p67
      %p69 = scmp.ne.s32.totalorder %s57, %s58
      %p70 = scmp.eq.s32.totalorder %s27, 2
      %p71 = por %p69, %p70
      %p73 = scmp.ne.s32.totalorder %s58, %s72
      %p74 = scmp.eq.s32.totalorder %s27, 0
      %p75 = por %p73, %p74
      %s77 = sadd.s32 %s76, 1
      %p80 = scmp.eq.s32.totalorder %s21, 2
      %p81 = scmp.ne.s32.totalorder %s76, %s78
      %p82 = scmp.eq.s32.totalorder %s21, 0
      %p83 = por %p81, %p82
      %p84 = scmp.ne.s32.totalorder %s76, %s78
      %p85 = scmp.eq.s32.totalorder %s26, 2
      %p86 = por %p84, %p85
      %p87 = scmp.ne.s32.totalorder %s78, %s79
      %p88 = scmp.eq.s32.totalorder %s26, 0
      %p89 = por %p87, %p88
      %p90 = scmp.ne.s32.totalorder %s78, %s79
      %p91 = scmp.eq.s32.totalorder %s27, 2
      %p92 = por %p90, %p91
      %p94 = scmp.ne.s32.totalorder %s79, %s93
      %p95 = scmp.eq.s32.totalorder %s27, 0
      %p96 = por %p94, %p95
      %s98 = sadd.s32 %s97, 1
      %p101 = scmp.eq.s32.totalorder %s21, 2
      %p102 = scmp.ne.s32.totalorder %s97, %s99
      %p103 = scmp.eq.s32.totalorder %s21, 0
      %p104 = por %p102, %p103
      %p105 = scmp.ne.s32.totalorder %s97, %s99
      %p106 = scmp.eq.s32.totalorder %s26, 2
      %p107 = por %p105, %p106
      %p108 = scmp.ne.s32.totalorder %s99, %s100
      %p109 = scmp.eq.s32.totalorder %s26, 0
      %p110 = por %p108, %p109
      %p111 = scmp.ne.s32.totalorder %s99, %s100
      %p112 = scmp.eq.s32.totalorder %s27, 2
      %p113 = por %p111, %p112
      %p115 = scmp.ne.s32.totalorder %s100, %s114
      %p116 = scmp.eq.s32.totalorder %s27, 0
      %p117 = por %p115, %p116
      %s119 = sadd.s32 %s118, 1
      %p122 = scmp.eq.s32.totalorder %s21, 2
      %p123 = scmp.ne.s32.totalorder %s118, %s120
      %p124 = scmp.eq.s32.totalorder %s21, 0
      %p125 = por %p123, %p124
      %p126 = scmp.ne.s32.totalorder %s118, %s120
      %p127 = scmp.eq.s32.totalorder %s26, 2
      %p128 = por %p126, %p127
      %p129 = scmp.ne.s32.totalorder %s120, %s121
      %p130 = scmp.eq.s32.totalorder %s26, 0
      %p131 = por %p129, %p130
      %p132 = scmp.ne.s32.totalorder %s120, %s121
      %p133 = scmp.eq.s32.totalorder %s27, 2
      %p134 = por %p132, %p133
      %p136 = scmp.ne.s32.totalorder %s121, %s135
      %p137 = scmp.eq.s32.totalorder %s27, 0
      %p138 = por %p136, %p137
      %s140 = sadd.s32 %s139, 1
      %p143 = scmp.eq.s32.totalorder %s21, 2
      %p144 = scmp.ne.s32.totalorder %s139, %s141
      %p145 = scmp.eq.s32.totalorder %s21, 0
      %p146 = por %p144, %p145
      %p147 = scmp.ne.s32.totalorder %s139, %s141
      %p148 = scmp.eq.s32.totalorder %s26, 2
      %p149 = por %p147, %p148
      %p150 = scmp.ne.s32.totalorder %s141, %s142
      %p151 = scmp.eq.s32.totalorder %s26, 0
      %p152 = por %p150, %p151
      %p153 = scmp.ne.s32.totalorder %s141, %s142
      %p154 = scmp.eq.s32.totalorder %s27, 2
      %p155 = por %p153, %p154
      %p157 = scmp.ne.s32.totalorder %s142, %s156
      %p158 = scmp.eq.s32.totalorder %s27, 0
      %p159 = por %p157, %p158
      %s161 = sadd.s32 %s160, 1
      %p164 = scmp.eq.s32.totalorder %s21, 2
      %p165 = scmp.ne.s32.totalorder %s160, %s162
      %p166 = scmp.eq.s32.totalorder %s21, 0
      %p167 = por %p165, %p166
      %p168 = scmp.ne.s32.totalorder %s160, %s162
      %p169 = scmp.eq.s32.totalorder %s26, 2
      %p170 = por %p168, %p169
      %p171 = scmp.ne.s32.totalorder %s162, %s163
      %p172 = scmp.eq.s32.totalorder %s26, 0
      %p173 = por %p171, %p172
      %p174 = scmp.ne.s32.totalorder %s162, %s163
      %p175 = scmp.eq.s32.totalorder %s27, 2
      %p176 = por %p174, %p175
      %p178 = scmp.ne.s32.totalorder %s163, %s177
      %p179 = scmp.eq.s32.totalorder %s27, 0
      %p180 = por %p178, %p179
      %s181 = ssub.s32 %s21, %s28
      %p182 = scmp.eq.s32.totalorder %s181, 0
      %s184 = sadd.s32 %s183, 1
      %s185 = scalar_select %p182, %s183, %s184
      %p188 = pneg %p182
      %p189 = scmp.eq.s32.totalorder %s21, 2
      %p190 = por %p188, %p189
      %p191 = scmp.ne.s32.totalorder %s183, %s186
      %p192 = scmp.eq.s32.totalorder %s21, 0
      %p193 = por %p191, %p192
      %p194 = scmp.ne.s32.totalorder %s183, %s186
      %p195 = scmp.eq.s32.totalorder %s26, 2
      %p196 = por %p194, %p195
      %p197 = scmp.ne.s32.totalorder %s186, %s187
      %p198 = scmp.eq.s32.totalorder %s26, 0
      %p199 = por %p197, %p198
      %p200 = scmp.ne.s32.totalorder %s186, %s187
      %p201 = scmp.eq.s32.totalorder %s27, 2
      %p202 = por %p200, %p201
      %p204 = scmp.ne.s32.totalorder %s187, %s203
      %p205 = scmp.eq.s32.totalorder %s27, 0
      %p206 = por %p204, %p205
      %p207 = scmp.le.s32.totalorder 1, %s21
      %p208 = scmp.lt.s32.totalorder %s21, 4
      %p209 = pnand %p207, %p208
      %p210 = pneg %p209
      // Predicated region
      $region9: #{tpu_custom_call.1} parent=5 // pred_check
        _
      $region10: #{tpu_custom_call.1} parent=5 // pred_check_branch
        %212 = sbr.rel (%p209) target = $region12
      $region11: #{tpu_custom_call.1} parent=5 // pred_region
        %s213 = ssub.s32 %s21, 1
        // Predicated region
        $region13: #{tpu_custom_call.1} parent=11 // pred_check
          %p214 = pneg %p68
        $region14: #{tpu_custom_call.1} parent=11 // pred_check_branch
          %216 = sbr.rel (%p214) target = $region16
        $region15: #{tpu_custom_call.1} parent=11 // pred_region
          %218 = vsyncadd [#allocation6], 0
          %s219 = sshll.u32 %s1, 4
          %s220 = int_to_ptr.hbm [resolvable:$true] %s219
          %s221 = sshll.u32 [#allocation5], 4
          %s222 = int_to_ptr.vmem [resolvable:$true] %s221
          %227 = dma.hbm_to_vmem [thread:$0]  %s220, 6272, %s222, [#allocation6], 64, 64, 4
        $region16: #{tpu_custom_call.1} parent=11 // pred_fallthru
          _
        // Predicated region
        $region17: #{tpu_custom_call.1} parent=11 // pred_check
          %p228 = pneg %p89
        $region18: #{tpu_custom_call.1} parent=11 // pred_check_branch
          %230 = sbr.rel (%p228) target = $region20
        $region19: #{tpu_custom_call.1} parent=11 // pred_region
          _
        $region20: #{tpu_custom_call.1} parent=11 // pred_fallthru
          _
        // Predicated region
        $region21: #{tpu_custom_call.1} parent=11 // pred_check
          %p231 = pneg %p110
        $region22: #{tpu_custom_call.1} parent=11 // pred_check_branch
          %233 = sbr.rel (%p231) target = $region24
        $region23: #{tpu_custom_call.1} parent=11 // pred_region
          %235 = vsyncadd [#allocation6], 0
          %s236 = sshll.u32 %s3, 4
          %s237 = int_to_ptr.hbm [resolvable:$true] %s236
          %s238 = sshll.u32 [#allocation7], 4
          %s239 = int_to_ptr.vmem [resolvable:$true] %s238
          %244 = dma.hbm_to_vmem [thread:$0]  %s237, 1024, %s239, [#allocation6], 64, 64, 4
        $region24: #{tpu_custom_call.1} parent=11 // pred_fallthru
          _
        // Predicated region
        $region25: #{tpu_custom_call.1} parent=11 // pred_check
          %p245 = pneg %p131
        $region26: #{tpu_custom_call.1} parent=11 // pred_check_branch
          %247 = sbr.rel (%p245) target = $region28
        $region27: #{tpu_custom_call.1} parent=11 // pred_region
          _
        $region28: #{tpu_custom_call.1} parent=11 // pred_fallthru
          _
        // Predicated region
        $region29: #{tpu_custom_call.1} parent=11 // pred_check
          %p248 = pneg %p152
        $region30: #{tpu_custom_call.1} parent=11 // pred_check_branch
          %250 = sbr.rel (%p248) target = $region32
        $region31: #{tpu_custom_call.1} parent=11 // pred_region
          %252 = vsyncadd [#allocation9], 0
          %s253 = sshll.u32 %s5, 4
          %s254 = int_to_ptr.hbm [resolvable:$true] %s253
          %s255 = sshll.u32 [#allocation8], 4
          %s256 = int_to_ptr.vmem [resolvable:$true] %s255
          %261 = dma.hbm_to_vmem [thread:$0]  %s254, 1024, %s256, [#allocation9], 64, 64, 4
        $region32: #{tpu_custom_call.1} parent=11 // pred_fallthru
          _
        // Predicated region
        $region33: #{tpu_custom_call.1} parent=11 // pred_check
          %p262 = pneg %p173
        $region34: #{tpu_custom_call.1} parent=11 // pred_check_branch
          %264 = sbr.rel (%p262) target = $region36
        $region35: #{tpu_custom_call.1} parent=11 // pred_region
          _
        $region36: #{tpu_custom_call.1} parent=11 // pred_fallthru
          _
      $region12: #{tpu_custom_call.1} parent=5 // pred_fallthru
        _
      %p265 = scmp.lt.s32.totalorder %s21, 3
      // Predicated region
      $region37: #{tpu_custom_call.1} parent=5 // pred_check
        %p266 = pneg %p265
      $region38: #{tpu_custom_call.1} parent=5 // pred_check_branch
        %268 = sbr.rel (%p266) target = $region40
      $region39: #{tpu_custom_call.1} parent=5 // pred_region
        // Predicated region
        $region41: #{tpu_custom_call.1} parent=39 // pred_check
          %p269 = pneg %p41
        $region42: #{tpu_custom_call.1} parent=39 // pred_check_branch
          %271 = sbr.rel (%p269) target = $region44
        $region43: #{tpu_custom_call.1} parent=39 // pred_region
          %s272 = sand.u32 %s31, 1
          %s273 = scalar_lea.sflag [#allocation3], %s272
          %s274 = sand.u32 %s31, 1
          %s275 = smul.addr %s274, 56
          %s276 = scalar_lea.vmem [#allocation2], %s275
          %278 = vsyncadd %s273, 0
          %s279 = smul.addr %s21, 7
          %s280 = smul.addr %s279, 8
          %s281 = scalar_lea.hbm %s0, %s280
          %s283 = sshll.u32 %s281, 4
          %s284 = int_to_ptr.hbm [resolvable:$true] %s283
          %s285 = sshll.u32 %s276, 4
          %s286 = int_to_ptr.vmem [resolvable:$true] %s285
          %288 = dma.hbm_to_vmem [thread:$0]  %s284, 896, %s286, %s273
        $region44: #{tpu_custom_call.1} parent=39 // pred_fallthru
          _
      $region40: #{tpu_custom_call.1} parent=5 // pred_fallthru
        _
      %p289 = scmp.le.s32.totalorder 1, %s21
      %p290 = scmp.lt.s32.totalorder %s21, 4
      %p291 = pnand %p289, %p290
      %p292 = pneg %p291
      // Predicated region
      $region45: #{tpu_custom_call.1} parent=5 // pred_check
        _
      $region46: #{tpu_custom_call.1} parent=5 // pred_check_branch
        %294 = sbr.rel (%p291) target = $region48
      $region47: #{tpu_custom_call.1} parent=5 // pred_region
        %s295 = ssub.s32 %s21, 1
        %s296 = sand.u32 %s34, 1
        %s297 = scalar_lea.sflag [#allocation3], %s296
        %s298 = sand.u32 %s34, 1
        %s299 = smul.addr %s298, 56
        %s300 = scalar_lea.vmem [#allocation2], %s299
        // Predicated region
        $region49: #{tpu_custom_call.1} parent=47 // pred_check
          %p301 = pneg %p47
        $region50: #{tpu_custom_call.1} parent=47 // pred_check_branch
          %303 = sbr.rel (%p301) target = $region52
        $region51: #{tpu_custom_call.1} parent=47 // pred_region
          %305 = dma.done %s297, 896
        $region52: #{tpu_custom_call.1} parent=47 // pred_fallthru
          _
        // Predicated region
        $region53: #{tpu_custom_call.1} parent=47 // pred_check
          %p306 = pneg %p68
        $region54: #{tpu_custom_call.1} parent=47 // pred_check_branch
          %308 = sbr.rel (%p306) target = $region56
        $region55: #{tpu_custom_call.1} parent=47 // pred_region
          %310 = dma.done [#allocation6], 6272
        $region56: #{tpu_custom_call.1} parent=47 // pred_fallthru
          _
        // Predicated region
        $region57: #{tpu_custom_call.1} parent=47 // pred_check
          %p311 = pneg %p110
        $region58: #{tpu_custom_call.1} parent=47 // pred_check_branch
          %313 = sbr.rel (%p311) target = $region60
        $region59: #{tpu_custom_call.1} parent=47 // pred_region
          %315 = dma.done [#allocation6], 1024
        $region60: #{tpu_custom_call.1} parent=47 // pred_fallthru
          _
        // Predicated region
        $region61: #{tpu_custom_call.1} parent=47 // pred_check
          %p316 = pneg %p152
        $region62: #{tpu_custom_call.1} parent=47 // pred_check_branch
          %318 = sbr.rel (%p316) target = $region64
        $region63: #{tpu_custom_call.1} parent=47 // pred_region
          %320 = dma.done [#allocation9], 1024
        $region64: #{tpu_custom_call.1} parent=47 // pred_fallthru
          _
        %s321 = sand.u32 %s34, 1
        %s322 = scalar_lea.sflag [#allocation3], %s321
        %s323 = sand.u32 %s34, 1
        %s324 = smul.addr %s323, 56
        %s325 = scalar_lea.vmem [#allocation2], %s324
        %p326 = pneg %p47
        %p327 = pneg %p44
        %p328 = pneg %p68
        %p329 = pneg %p65
        %p330 = pneg %p89
        %p331 = pneg %p86
        %p332 = pneg %p110
        %p333 = pneg %p107
        %p334 = pneg %p131
        %p335 = pneg %p128
        %p336 = pneg %p152
        %p337 = pneg %p149
        %p338 = pneg %p173
        %p339 = pneg %p170
        %p340 = pneg %p199
        %p341 = pneg %p196
        %s342 = sand.u32 %s186, 1
        %s343 = scalar_lea.sflag [#allocation4], %s342
        %s344 = sand.u32 %s186, 1
        %s345 = smul.addr %s344, 4
        %s346 = scalar_lea.vmem [#allocation10], %s345
        %v348 = vld [vmem:[%s300] sm:$0xff]
        %v349 = vld [vmem:[%s300 + $0x8] sm:$0xff]
        %v350 = vld [vmem:[%s300 + $0x10] sm:$0xff]
        %v351 = vld [vmem:[%s300 + $0x18] sm:$0xff]
        %v352 = vld [vmem:[%s300 + $0x20] sm:$0xff]
        %v353 = vld [vmem:[%s300 + $0x28] sm:$0xff]
        %v354 = vld [vmem:[%s300 + $0x30] sm:$0xff]
        %v355 = vpack.c.bf16 %v348, %v348
        %v356 = vpack.c.bf16 %v349, %v349
        %v357 = vpack.c.bf16 %v350, %v350
        %v358 = vpack.c.bf16 %v351, %v351
        %v359 = vpack.c.bf16 %v352, %v352
        %v360 = vpack.c.bf16 %v353, %v353
        %v361 = vpack.c.bf16 %v354, %v354
        %v362 = vld [vmem:[#allocation5] sm:$0xf]
        %v363 = vld [vmem:[#allocation5 + $0x4] sm:$0xf]
        %v364 = vld [vmem:[#allocation5 + $0x8] sm:$0xf]
        %v365 = vld [vmem:[#allocation5 + $0xc] sm:$0xf]
        %v366 = vld [vmem:[#allocation5 + $0x10] sm:$0xf]
        %v367 = vld [vmem:[#allocation5 + $0x14] sm:$0xf]
        %v368 = vld [vmem:[#allocation5 + $0x18] sm:$0xf]
        %v369 = vld [vmem:[#allocation5 + $0x1c] sm:$0xf]
        %v370 = vld [vmem:[#allocation5 + $0x20] sm:$0xf]
        %v371 = vld [vmem:[#allocation5 + $0x24] sm:$0xf]
        %v372 = vld [vmem:[#allocation5 + $0x28] sm:$0xf]
        %v373 = vld [vmem:[#allocation5 + $0x2c] sm:$0xf]
        %v374 = vld [vmem:[#allocation5 + $0x30] sm:$0xf]
        %v375 = vld [vmem:[#allocation5 + $0x34] sm:$0xf]
        %v376 = vld [vmem:[#allocation5 + $0x38] sm:$0xf]
        %v377 = vld [vmem:[#allocation5 + $0x3c] sm:$0xf]
        %v378 = vld [vmem:[#allocation5 + $0x40] sm:$0xf]
        %v379 = vld [vmem:[#allocation5 + $0x44] sm:$0xf]
        %v380 = vld [vmem:[#allocation5 + $0x48] sm:$0xf]
        %v381 = vld [vmem:[#allocation5 + $0x4c] sm:$0xf]
        %v382 = vld [vmem:[#allocation5 + $0x50] sm:$0xf]
        %v383 = vld [vmem:[#allocation5 + $0x54] sm:$0xf]
        %v384 = vld [vmem:[#allocation5 + $0x58] sm:$0xf]
        %v385 = vld [vmem:[#allocation5 + $0x5c] sm:$0xf]
        %v386 = vld [vmem:[#allocation5 + $0x60] sm:$0xf]
        %v387 = vld [vmem:[#allocation5 + $0x64] sm:$0xf]
        %v388 = vld [vmem:[#allocation5 + $0x68] sm:$0xf]
        %v389 = vld [vmem:[#allocation5 + $0x6c] sm:$0xf]
        %v390 = vld [vmem:[#allocation5 + $0x70] sm:$0xf]
        %v391 = vld [vmem:[#allocation5 + $0x74] sm:$0xf]
        %v392 = vld [vmem:[#allocation5 + $0x78] sm:$0xf]
        %v393 = vld [vmem:[#allocation5 + $0x7c] sm:$0xf]
        %v394 = vld [vmem:[#allocation5 + $0x80] sm:$0xf]
        %v395 = vld [vmem:[#allocation5 + $0x84] sm:$0xf]
        %v396 = vld [vmem:[#allocation5 + $0x88] sm:$0xf]
        %v397 = vld [vmem:[#allocation5 + $0x8c] sm:$0xf]
        %v398 = vld [vmem:[#allocation5 + $0x90] sm:$0xf]
        %v399 = vld [vmem:[#allocation5 + $0x94] sm:$0xf]
        %v400 = vld [vmem:[#allocation5 + $0x98] sm:$0xf]
        %v401 = vld [vmem:[#allocation5 + $0x9c] sm:$0xf]
        %v402 = vld [vmem:[#allocation5 + $0xa0] sm:$0xf]
        %v403 = vld [vmem:[#allocation5 + $0xa4] sm:$0xf]
        %v404 = vld [vmem:[#allocation5 + $0xa8] sm:$0xf]
        %v405 = vld [vmem:[#allocation5 + $0xac] sm:$0xf]
        %v406 = vld [vmem:[#allocation5 + $0xb0] sm:$0xf]
        %v407 = vld [vmem:[#allocation5 + $0xb4] sm:$0xf]
        %v408 = vld [vmem:[#allocation5 + $0xb8] sm:$0xf]
        %v409 = vld [vmem:[#allocation5 + $0xbc] sm:$0xf]
        %v410 = vld [vmem:[#allocation5 + $0xc0] sm:$0xf]
        %v411 = vld [vmem:[#allocation5 + $0xc4] sm:$0xf]
        %v412 = vld [vmem:[#allocation5 + $0xc8] sm:$0xf]
        %v413 = vld [vmem:[#allocation5 + $0xcc] sm:$0xf]
        %v414 = vld [vmem:[#allocation5 + $0xd0] sm:$0xf]
        %v415 = vld [vmem:[#allocation5 + $0xd4] sm:$0xf]
        %v416 = vld [vmem:[#allocation5 + $0xd8] sm:$0xf]
        %v417 = vld [vmem:[#allocation5 + $0xdc] sm:$0xf]
        %v418 = vld [vmem:[#allocation5 + $0xe0] sm:$0xf]
        %v419 = vld [vmem:[#allocation5 + $0xe4] sm:$0xf]
        %v420 = vld [vmem:[#allocation5 + $0xe8] sm:$0xf]
        %v421 = vld [vmem:[#allocation5 + $0xec] sm:$0xf]
        %v422 = vld [vmem:[#allocation5 + $0xf0] sm:$0xf]
        %v423 = vld [vmem:[#allocation5 + $0xf4] sm:$0xf]
        %v424 = vld [vmem:[#allocation5 + $0xf8] sm:$0xf]
        %v425 = vld [vmem:[#allocation5 + $0xfc] sm:$0xf]
        %v426 = vld [vmem:[#allocation5 + $0x100] sm:$0xf]
        %v427 = vld [vmem:[#allocation5 + $0x104] sm:$0xf]
        %v428 = vld [vmem:[#allocation5 + $0x108] sm:$0xf]
        %v429 = vld [vmem:[#allocation5 + $0x10c] sm:$0xf]
        %v430 = vld [vmem:[#allocation5 + $0x110] sm:$0xf]
        %v431 = vld [vmem:[#allocation5 + $0x114] sm:$0xf]
        %v432 = vld [vmem:[#allocation5 + $0x118] sm:$0xf]
        %v433 = vld [vmem:[#allocation5 + $0x11c] sm:$0xf]
        %v434 = vld [vmem:[#allocation5 + $0x120] sm:$0xf]
        %v435 = vld [vmem:[#allocation5 + $0x124] sm:$0xf]
        %v436 = vld [vmem:[#allocation5 + $0x128] sm:$0xf]
        %v437 = vld [vmem:[#allocation5 + $0x12c] sm:$0xf]
        %v438 = vld [vmem:[#allocation5 + $0x130] sm:$0xf]
        %v439 = vld [vmem:[#allocation5 + $0x134] sm:$0xf]
        %v440 = vld [vmem:[#allocation5 + $0x138] sm:$0xf]
        %v441 = vld [vmem:[#allocation5 + $0x13c] sm:$0xf]
        %v442 = vld [vmem:[#allocation5 + $0x140] sm:$0xf]
        %v443 = vld [vmem:[#allocation5 + $0x144] sm:$0xf]
        %v444 = vld [vmem:[#allocation5 + $0x148] sm:$0xf]
        %v445 = vld [vmem:[#allocation5 + $0x14c] sm:$0xf]
        %v446 = vld [vmem:[#allocation5 + $0x150] sm:$0xf]
        %v447 = vld [vmem:[#allocation5 + $0x154] sm:$0xf]
        %v448 = vld [vmem:[#allocation5 + $0x158] sm:$0xf]
        %v449 = vld [vmem:[#allocation5 + $0x15c] sm:$0xf]
        %v450 = vld [vmem:[#allocation5 + $0x160] sm:$0xf]
        %v451 = vld [vmem:[#allocation5 + $0x164] sm:$0xf]
        %v452 = vld [vmem:[#allocation5 + $0x168] sm:$0xf]
        %v453 = vld [vmem:[#allocation5 + $0x16c] sm:$0xf]
        %v454 = vld [vmem:[#allocation5 + $0x170] sm:$0xf]
        %v455 = vld [vmem:[#allocation5 + $0x174] sm:$0xf]
        %v456 = vld [vmem:[#allocation5 + $0x178] sm:$0xf]
        %v457 = vld [vmem:[#allocation5 + $0x17c] sm:$0xf]
        %v458 = vld [vmem:[#allocation5 + $0x180] sm:$0xf]
        %v459 = vld [vmem:[#allocation5 + $0x184] sm:$0xf]
        %v460 = vld [vmem:[%s2] sm:$0x1]
        %v462 = vperm.slane %v460, 0
        %v562 = vunpack.c.l.b16 %v362
        %v563 = vunpack.c.l.b16 %v363
        %v564 = vunpack.c.l.b16 %v364
        %v565 = vunpack.c.l.b16 %v365
        %v566 = vunpack.c.l.b16 %v366
        %v567 = vunpack.c.l.b16 %v367
        %v568 = vunpack.c.l.b16 %v368
        %v569 = vunpack.c.l.b16 %v369
        %v570 = vunpack.c.l.b16 %v370
        %v571 = vunpack.c.l.b16 %v371
        %v572 = vunpack.c.l.b16 %v372
        %v573 = vunpack.c.l.b16 %v373
        %v574 = vunpack.c.l.b16 %v374
        %v575 = vunpack.c.l.b16 %v375
        %v576 = vunpack.c.l.b16 %v376
        %v577 = vunpack.c.l.b16 %v377
        %v578 = vunpack.c.l.b16 %v378
        %v579 = vunpack.c.l.b16 %v379
        %v580 = vunpack.c.l.b16 %v380
        %v581 = vunpack.c.l.b16 %v381
        %v582 = vunpack.c.l.b16 %v382
        %v583 = vunpack.c.l.b16 %v383
        %v584 = vunpack.c.l.b16 %v384
        %v585 = vunpack.c.l.b16 %v385
        %v586 = vunpack.c.l.b16 %v386
        %v587 = vunpack.c.l.b16 %v387
        %v588 = vunpack.c.l.b16 %v388
        %v589 = vunpack.c.l.b16 %v389
        %v590 = vunpack.c.l.b16 %v390
        %v591 = vunpack.c.l.b16 %v391
        %v592 = vunpack.c.l.b16 %v392
        %v593 = vunpack.c.l.b16 %v393
        %v594 = vunpack.c.l.b16 %v394
        %v595 = vunpack.c.l.b16 %v395
        %v596 = vunpack.c.l.b16 %v396
        %v597 = vunpack.c.l.b16 %v397
        %v598 = vunpack.c.l.b16 %v398
        %v599 = vunpack.c.l.b16 %v399
        %v600 = vunpack.c.l.b16 %v400
        %v601 = vunpack.c.l.b16 %v401
        %v602 = vunpack.c.l.b16 %v402
        %v603 = vunpack.c.l.b16 %v403
        %v604 = vunpack.c.l.b16 %v404
        %v605 = vunpack.c.l.b16 %v405
        %v606 = vunpack.c.l.b16 %v406
        %v607 = vunpack.c.l.b16 %v407
        %v608 = vunpack.c.l.b16 %v408
        %v609 = vunpack.c.l.b16 %v409
        %v610 = vunpack.c.l.b16 %v410
        %v611 = vunpack.c.l.b16 %v411
        %v612 = vunpack.c.l.b16 %v412
        %v613 = vunpack.c.l.b16 %v413
        %v614 = vunpack.c.l.b16 %v414
        %v615 = vunpack.c.l.b16 %v415
        %v616 = vunpack.c.l.b16 %v416
        %v617 = vunpack.c.l.b16 %v417
        %v618 = vunpack.c.l.b16 %v418
        %v619 = vunpack.c.l.b16 %v419
        %v620 = vunpack.c.l.b16 %v420
        %v621 = vunpack.c.l.b16 %v421
        %v622 = vunpack.c.l.b16 %v422
        %v623 = vunpack.c.l.b16 %v423
        %v624 = vunpack.c.l.b16 %v424
        %v625 = vunpack.c.l.b16 %v425
        %v626 = vunpack.c.l.b16 %v426
        %v627 = vunpack.c.l.b16 %v427
        %v628 = vunpack.c.l.b16 %v428
        %v629 = vunpack.c.l.b16 %v429
        %v630 = vunpack.c.l.b16 %v430
        %v631 = vunpack.c.l.b16 %v431
        %v632 = vunpack.c.l.b16 %v432
        %v633 = vunpack.c.l.b16 %v433
        %v634 = vunpack.c.l.b16 %v434
        %v635 = vunpack.c.l.b16 %v435
        %v636 = vunpack.c.l.b16 %v436
        %v637 = vunpack.c.l.b16 %v437
        %v638 = vunpack.c.l.b16 %v438
        %v639 = vunpack.c.l.b16 %v439
        %v640 = vunpack.c.l.b16 %v440
        %v641 = vunpack.c.l.b16 %v441
        %v642 = vunpack.c.l.b16 %v442
        %v643 = vunpack.c.l.b16 %v443
        %v644 = vunpack.c.l.b16 %v444
        %v645 = vunpack.c.l.b16 %v445
        %v646 = vunpack.c.l.b16 %v446
        %v647 = vunpack.c.l.b16 %v447
        %v648 = vunpack.c.l.b16 %v448
        %v649 = vunpack.c.l.b16 %v449
        %v650 = vunpack.c.l.b16 %v450
        %v651 = vunpack.c.l.b16 %v451
        %v652 = vunpack.c.l.b16 %v452
        %v653 = vunpack.c.l.b16 %v453
        %v654 = vunpack.c.l.b16 %v454
        %v655 = vunpack.c.l.b16 %v455
        %v656 = vunpack.c.l.b16 %v456
        %v657 = vunpack.c.l.b16 %v457
        %v658 = vunpack.c.l.b16 %v458
        %v659 = vunpack.c.l.b16 %v459
        %v660 = vpack.c.b16 %v563, %v562
        %v661 = vpack.c.b16 %v565, %v564
        %v662 = vpack.c.b16 %v567, %v566
        %v663 = vpack.c.b16 %v569, %v568
        %v664 = vpack.c.b16 %v571, %v570
        %v665 = vpack.c.b16 %v573, %v572
        %v666 = vpack.c.b16 %v575, %v574
        %v667 = vpack.c.b16 %v577, %v576
        %v668 = vpack.c.b16 %v579, %v578
        %v669 = vpack.c.b16 %v581, %v580
        %v670 = vpack.c.b16 %v583, %v582
        %v671 = vpack.c.b16 %v585, %v584
        %v672 = vpack.c.b16 %v587, %v586
        %v673 = vpack.c.b16 %v589, %v588
        %v674 = vpack.c.b16 %v591, %v590
        %v675 = vpack.c.b16 %v593, %v592
        %v676 = vpack.c.b16 %v595, %v594
        %v677 = vpack.c.b16 %v597, %v596
        %v678 = vpack.c.b16 %v599, %v598
        %v679 = vpack.c.b16 %v601, %v600
        %v680 = vpack.c.b16 %v603, %v602
        %v681 = vpack.c.b16 %v605, %v604
        %v682 = vpack.c.b16 %v607, %v606
        %v683 = vpack.c.b16 %v609, %v608
        %v684 = vpack.c.b16 %v611, %v610
        %v685 = vpack.c.b16 %v613, %v612
        %v686 = vpack.c.b16 %v615, %v614
        %v687 = vpack.c.b16 %v617, %v616
        %v688 = vpack.c.b16 %v619, %v618
        %v689 = vpack.c.b16 %v621, %v620
        %v690 = vpack.c.b16 %v623, %v622
        %v691 = vpack.c.b16 %v625, %v624
        %v692 = vpack.c.b16 %v627, %v626
        %v693 = vpack.c.b16 %v629, %v628
        %v694 = vpack.c.b16 %v631, %v630
        %v695 = vpack.c.b16 %v633, %v632
        %v696 = vpack.c.b16 %v635, %v634
        %v697 = vpack.c.b16 %v637, %v636
        %v698 = vpack.c.b16 %v639, %v638
        %v699 = vpack.c.b16 %v641, %v640
        %v700 = vpack.c.b16 %v643, %v642
        %v701 = vpack.c.b16 %v645, %v644
        %v702 = vpack.c.b16 %v647, %v646
        %v703 = vpack.c.b16 %v649, %v648
        %v704 = vpack.c.b16 %v651, %v650
        %v705 = vpack.c.b16 %v653, %v652
        %v706 = vpack.c.b16 %v655, %v654
        %v707 = vpack.c.b16 %v657, %v656
        %v708 = vpack.c.b16 %v659, %v658
        %vm758 = vcmask 130048
        %v760 = vsel %vm758, %v361, 0
        %762 = vmatpush.bf16.msra.mxu0 %v667
        %763 = vmatpush.bf16.msra.mxu0 %v666
        %764 = vmatpush.bf16.msra.mxu0 %v665
        %765 = vmatpush.bf16.msra.mxu0 %v664
        %766 = vmatpush.bf16.msra.mxu0 %v663
        %767 = vmatpush.bf16.msra.mxu0 %v662
        %768 = vmatpush.bf16.msra.mxu0 %v661
        %769 = vmatpush.bf16.msra.mxu0 %v660
        %770 = vmatmul.bf16.gmra.mxu0 %v355
        %v771 = vpop.f32.mrf.mxu0
        %v772 = vadd.f32 %v462, %v771
        %v773 = vpop.f32.mrf.mxu0
        %774 = vdwg.mxu0
        %775 = vmatpush.bf16.msra.mxu0 %v675
        %776 = vmatpush.bf16.msra.mxu0 %v674
        %777 = vmatpush.bf16.msra.mxu0 %v673
        %778 = vmatpush.bf16.msra.mxu0 %v672
        %779 = vmatpush.bf16.msra.mxu0 %v671
        %780 = vmatpush.bf16.msra.mxu0 %v670
        %781 = vmatpush.bf16.msra.mxu0 %v669
        %782 = vmatpush.bf16.msra.mxu0 %v668
        %783 = vmatmul.bf16.gmra.mxu0 %v356
        %v784 = vpop.f32.mrf.mxu0
        %v785 = vadd.f32 %v772, %v784
        %v786 = vpop.f32.mrf.mxu0
        %787 = vdwg.mxu0
        %788 = vmatpush.bf16.msra.mxu0 %v683
        %789 = vmatpush.bf16.msra.mxu0 %v682
        %790 = vmatpush.bf16.msra.mxu0 %v681
        %791 = vmatpush.bf16.msra.mxu0 %v680
        %792 = vmatpush.bf16.msra.mxu0 %v679
        %793 = vmatpush.bf16.msra.mxu0 %v678
        %794 = vmatpush.bf16.msra.mxu0 %v677
        %795 = vmatpush.bf16.msra.mxu0 %v676
        %796 = vmatmul.bf16.gmra.mxu0 %v357
        %v797 = vpop.f32.mrf.mxu0
        %v798 = vadd.f32 %v785, %v797
        %v799 = vpop.f32.mrf.mxu0
        %800 = vdwg.mxu0
        %801 = vmatpush.bf16.msra.mxu0 %v691
        %802 = vmatpush.bf16.msra.mxu0 %v690
        %803 = vmatpush.bf16.msra.mxu0 %v689
        %804 = vmatpush.bf16.msra.mxu0 %v688
        %805 = vmatpush.bf16.msra.mxu0 %v687
        %806 = vmatpush.bf16.msra.mxu0 %v686
        %807 = vmatpush.bf16.msra.mxu0 %v685
        %808 = vmatpush.bf16.msra.mxu0 %v684
        %809 = vmatmul.bf16.gmra.mxu0 %v358
        %v810 = vpop.f32.mrf.mxu0
        %v811 = vadd.f32 %v798, %v810
        %v812 = vpop.f32.mrf.mxu0
        %813 = vdwg.mxu0
        %814 = vmatpush.bf16.msra.mxu0 %v699
        %815 = vmatpush.bf16.msra.mxu0 %v698
        %816 = vmatpush.bf16.msra.mxu0 %v697
        %817 = vmatpush.bf16.msra.mxu0 %v696
        %818 = vmatpush.bf16.msra.mxu0 %v695
        %819 = vmatpush.bf16.msra.mxu0 %v694
        %820 = vmatpush.bf16.msra.mxu0 %v693
        %821 = vmatpush.bf16.msra.mxu0 %v692
        %822 = vmatmul.bf16.gmra.mxu0 %v359
        %v823 = vpop.f32.mrf.mxu0
        %v824 = vadd.f32 %v811, %v823
        %v825 = vpop.f32.mrf.mxu0
        %826 = vdwg.mxu0
        %827 = vmatpush.bf16.msra.mxu0 %v707
        %828 = vmatpush.bf16.msra.mxu0 %v706
        %829 = vmatpush.bf16.msra.mxu0 %v705
        %830 = vmatpush.bf16.msra.mxu0 %v704
        %831 = vmatpush.bf16.msra.mxu0 %v703
        %832 = vmatpush.bf16.msra.mxu0 %v702
        %833 = vmatpush.bf16.msra.mxu0 %v701
        %834 = vmatpush.bf16.msra.mxu0 %v700
        %835 = vmatmul.bf16.gmra.mxu0 %v360
        %v836 = vpop.f32.mrf.mxu0
        %v837 = vadd.f32 %v824, %v836
        %v838 = vpop.f32.mrf.mxu0
        %839 = vdwg.mxu0
        %840 = vmatpush.bf16.msra.mxu0 0
        %841 = vmatpush.bf16.msra.mxu0 0
        %842 = vmatpush.bf16.msra.mxu0 0
        %843 = vmatpush.bf16.msra.mxu0 0
        %844 = vmatpush.bf16.msra.mxu0 0
        %845 = vmatpush.bf16.msra.mxu0 0
        %846 = vmatpush.bf16.msra.mxu0 0
        %847 = vmatpush.bf16.msra.mxu0 %v708
        %848 = vmatmul.bf16.gmra.mxu0 %v760
        %v849 = vpop.f32.mrf.mxu0
        %v850 = vadd.f32 %v837, %v849
        %v851 = vpop.f32.mrf.mxu0
        %852 = vdwg.mxu0
        %v853 = vmax.f32 %v850, 0.0
        %v854 = vpack.c.bf16 %v853, %v853
        %v855 = vld [vmem:[#allocation7] sm:$0xf]
        %v856 = vld [vmem:[#allocation7 + $0x4] sm:$0xf]
        %v857 = vld [vmem:[#allocation7 + $0x8] sm:$0xf]
        %v858 = vld [vmem:[#allocation7 + $0xc] sm:$0xf]
        %v859 = vld [vmem:[#allocation7 + $0x10] sm:$0xf]
        %v860 = vld [vmem:[#allocation7 + $0x14] sm:$0xf]
        %v861 = vld [vmem:[#allocation7 + $0x18] sm:$0xf]
        %v862 = vld [vmem:[#allocation7 + $0x1c] sm:$0xf]
        %v863 = vld [vmem:[#allocation7 + $0x20] sm:$0xf]
        %v864 = vld [vmem:[#allocation7 + $0x24] sm:$0xf]
        %v865 = vld [vmem:[#allocation7 + $0x28] sm:$0xf]
        %v866 = vld [vmem:[#allocation7 + $0x2c] sm:$0xf]
        %v867 = vld [vmem:[#allocation7 + $0x30] sm:$0xf]
        %v868 = vld [vmem:[#allocation7 + $0x34] sm:$0xf]
        %v869 = vld [vmem:[#allocation7 + $0x38] sm:$0xf]
        %v870 = vld [vmem:[#allocation7 + $0x3c] sm:$0xf]
        %v871 = vld [vmem:[%s4] sm:$0x1]
        %v873 = vperm.slane %v871, 0
        %v891 = vunpack.c.l.b16 %v855
        %v892 = vunpack.c.l.b16 %v856
        %v893 = vunpack.c.l.b16 %v857
        %v894 = vunpack.c.l.b16 %v858
        %v895 = vunpack.c.l.b16 %v859
        %v896 = vunpack.c.l.b16 %v860
        %v897 = vunpack.c.l.b16 %v861
        %v898 = vunpack.c.l.b16 %v862
        %v899 = vunpack.c.l.b16 %v863
        %v900 = vunpack.c.l.b16 %v864
        %v901 = vunpack.c.l.b16 %v865
        %v902 = vunpack.c.l.b16 %v866
        %v903 = vunpack.c.l.b16 %v867
        %v904 = vunpack.c.l.b16 %v868
        %v905 = vunpack.c.l.b16 %v869
        %v906 = vunpack.c.l.b16 %v870
        %v907 = vpack.c.b16 %v892, %v891
        %v908 = vpack.c.b16 %v894, %v893
        %v909 = vpack.c.b16 %v896, %v895
        %v910 = vpack.c.b16 %v898, %v897
        %v911 = vpack.c.b16 %v900, %v899
        %v912 = vpack.c.b16 %v902, %v901
        %v913 = vpack.c.b16 %v904, %v903
        %v914 = vpack.c.b16 %v906, %v905
        %923 = vmatpush.bf16.msra.mxu0 %v914
        %924 = vmatpush.bf16.msra.mxu0 %v913
        %925 = vmatpush.bf16.msra.mxu0 %v912
        %926 = vmatpush.bf16.msra.mxu0 %v911
        %927 = vmatpush.bf16.msra.mxu0 %v910
        %928 = vmatpush.bf16.msra.mxu0 %v909
        %929 = vmatpush.bf16.msra.mxu0 %v908
        %930 = vmatpush.bf16.msra.mxu0 %v907
        %931 = vmatmul.bf16.gmra.mxu0 %v854
        %v932 = vpop.f32.mrf.mxu0
        %v933 = vadd.f32 %v873, %v932
        %v934 = vpop.f32.mrf.mxu0
        %935 = vdwg.mxu0
        %v936 = vmax.f32 %v933, 0.0
        %v937 = vpack.c.bf16 %v936, %v936
        %v938 = vld [vmem:[#allocation8] sm:$0xf]
        %v939 = vld [vmem:[#allocation8 + $0x4] sm:$0xf]
        %v940 = vld [vmem:[#allocation8 + $0x8] sm:$0xf]
        %v941 = vld [vmem:[#allocation8 + $0xc] sm:$0xf]
        %v942 = vld [vmem:[#allocation8 + $0x10] sm:$0xf]
        %v943 = vld [vmem:[#allocation8 + $0x14] sm:$0xf]
        %v944 = vld [vmem:[#allocation8 + $0x18] sm:$0xf]
        %v945 = vld [vmem:[#allocation8 + $0x1c] sm:$0xf]
        %v946 = vld [vmem:[#allocation8 + $0x20] sm:$0xf]
        %v947 = vld [vmem:[#allocation8 + $0x24] sm:$0xf]
        %v948 = vld [vmem:[#allocation8 + $0x28] sm:$0xf]
        %v949 = vld [vmem:[#allocation8 + $0x2c] sm:$0xf]
        %v950 = vld [vmem:[#allocation8 + $0x30] sm:$0xf]
        %v951 = vld [vmem:[#allocation8 + $0x34] sm:$0xf]
        %v952 = vld [vmem:[#allocation8 + $0x38] sm:$0xf]
        %v953 = vld [vmem:[#allocation8 + $0x3c] sm:$0xf]
        %v954 = vld [vmem:[%s6] sm:$0x1]
        %v956 = vperm.slane %v954, 0
        %v974 = vunpack.c.l.b16 %v938
        %v975 = vunpack.c.l.b16 %v939
        %v976 = vunpack.c.l.b16 %v940
        %v977 = vunpack.c.l.b16 %v941
        %v978 = vunpack.c.l.b16 %v942
        %v979 = vunpack.c.l.b16 %v943
        %v980 = vunpack.c.l.b16 %v944
        %v981 = vunpack.c.l.b16 %v945
        %v982 = vunpack.c.l.b16 %v946
        %v983 = vunpack.c.l.b16 %v947
        %v984 = vunpack.c.l.b16 %v948
        %v985 = vunpack.c.l.b16 %v949
        %v986 = vunpack.c.l.b16 %v950
        %v987 = vunpack.c.l.b16 %v951
        %v988 = vunpack.c.l.b16 %v952
        %v989 = vunpack.c.l.b16 %v953
        %v990 = vpack.c.b16 %v975, %v974
        %v991 = vpack.c.b16 %v977, %v976
        %v992 = vpack.c.b16 %v979, %v978
        %v993 = vpack.c.b16 %v981, %v980
        %v994 = vpack.c.b16 %v983, %v982
        %v995 = vpack.c.b16 %v985, %v984
        %v996 = vpack.c.b16 %v987, %v986
        %v997 = vpack.c.b16 %v989, %v988
        %1006 = vmatpush.bf16.msra.mxu0 %v997
        %1007 = vmatpush.bf16.msra.mxu0 %v996
        %1008 = vmatpush.bf16.msra.mxu0 %v995
        %1009 = vmatpush.bf16.msra.mxu0 %v994
        %1010 = vmatpush.bf16.msra.mxu0 %v993
        %1011 = vmatpush.bf16.msra.mxu0 %v992
        %1012 = vmatpush.bf16.msra.mxu0 %v991
        %1013 = vmatpush.bf16.msra.mxu0 %v990
        %1014 = vmatmul.bf16.gmra.mxu0 %v937
        %v1015 = vpop.f32.mrf.mxu0
        %v1016 = vadd.f32 %v956, %v1015
        %v1017 = vpop.f32.mrf.mxu0
        %1018 = vdwg.mxu0
        %v1019 = vpack.c.bf16 %v1016, %v1016
        %1020 = vst [vmem:[%s346] sm:$0xf] %v1019
        %s1021 = sand.u32 %s186, 1
        %s1022 = scalar_lea.sflag [#allocation4], %s1021
        %s1023 = sand.u32 %s186, 1
        %s1024 = smul.addr %s1023, 4
        %s1025 = scalar_lea.vmem [#allocation10], %s1024
        // Predicated region
        $region65: #{tpu_custom_call.1} parent=47 // pred_check
          %p1026 = pneg %p196
        $region66: #{tpu_custom_call.1} parent=47 // pred_check_branch
          %1028 = sbr.rel (%p1026) target = $region68
        $region67: #{tpu_custom_call.1} parent=47 // pred_region
          %1030 = vsyncadd %s1022, 0
          %s1031 = smul.addr %s26, 4
          %s1032 = scalar_lea.hbm %s7, %s1031
          %s1034 = sshll.u32 %s1025, 4
          %s1035 = int_to_ptr.vmem [resolvable:$true] %s1034
          %s1036 = sshll.u32 %s1032, 4
          %s1037 = int_to_ptr.hbm [resolvable:$true] %s1036
          %1039 = dma.vmem_to_hbm [thread:$0]  %s1035, 64, %s1037, %s1022
        $region68: #{tpu_custom_call.1} parent=47 // pred_fallthru
          _
      $region48: #{tpu_custom_call.1} parent=5 // pred_fallthru
        _
      %p1040 = scmp.le.s32.totalorder 2, %s21
      // Predicated region
      $region69: #{tpu_custom_call.1} parent=5 // pred_check
        %p1041 = pneg %p1040
      $region70: #{tpu_custom_call.1} parent=5 // pred_check_branch
        %1043 = sbr.rel (%p1041) target = $region72
      $region71: #{tpu_custom_call.1} parent=5 // pred_region
        %s1044 = ssub.s32 %s21, 2
        // Predicated region
        $region73: #{tpu_custom_call.1} parent=71 // pred_check
          %p1045 = pneg %p202
        $region74: #{tpu_custom_call.1} parent=71 // pred_check_branch
          %1047 = sbr.rel (%p1045) target = $region76
        $region75: #{tpu_custom_call.1} parent=71 // pred_region
          %s1048 = sand.u32 %s187, 1
          %s1049 = scalar_lea.sflag [#allocation4], %s1048
          %s1050 = sand.u32 %s187, 1
          %s1051 = smul.addr %s1050, 4
          %s1052 = scalar_lea.vmem [#allocation10], %s1051
          %1054 = dma.done %s1049, 64
        $region76: #{tpu_custom_call.1} parent=71 // pred_fallthru
          _
      $region72: #{tpu_custom_call.1} parent=5 // pred_fallthru
        _
    $region6: #{tpu_custom_call.1} parent=1 // loop_footer
      %s25 = sadd.s32 1, %s21
    $region7: #{tpu_custom_call.1} parent=1 // loop_footer_branch
      %20 = sbr.rel target = $region3
    $region8: #{tpu_custom_call.1} parent=1 // loop_exit
      _
    %1055 = vsyncpa [#allocation3], 1
    %s1056 = scalar_lea.sflag [#allocation3], 1
    %1057 = vsyncpa %s1056, 1
    %1058 = vsyncpa [#allocation6], 1
    %1059 = vsyncpa [#allocation9], 1
    %1060 = vsyncpa [#allocation4], 1
    %s1061 = scalar_lea.sflag [#allocation4], 1
    %1062 = vsyncpa %s1061, 1

</llo_original>
